<compile_context>
chip_gen: v6e
topology: v6e:2x2x1
jax: 0.10.0
libtpu: 0.0.40
codegen_flags: <defaults>
</compile_context>

<pallas_src>
import functools

import jax
import jax.numpy as jnp
from jax.experimental import pallas as pl
from jax.experimental.pallas import tpu as pltpu


def _round_up(x, m):
    return ((x + m - 1) // m) * m


def _sublane_multiple(dtype):
    return {4: 8, 2: 16, 1: 32}.get(jnp.dtype(dtype).itemsize, 8)


def _vmem_budget():
    """(working-set budget, vmem_limit_bytes) tuned to the local TPU generation."""
    vmem_cap = 64 * 1024 * 1024                      # conservative v7x-class default
    try:
        info = pltpu.get_tpu_info()
        vmem_cap = int(getattr(info, "vmem_capacity_bytes", vmem_cap))
    except Exception:
        pass
    if vmem_cap >= 100 * 1024 * 1024:                # v5e / v6e: 128 MiB VMEM
        return 56 * 1024 * 1024, 100 * 1024 * 1024
    return 36 * 1024 * 1024, 52 * 1024 * 1024        # v7x-class: 64 MiB VMEM


def _choose_tiles(B, I, C, in_dtype, out_dtype):
    budget, vmem_limit = _vmem_budget()
    in_item = jnp.dtype(in_dtype).itemsize
    out_item = jnp.dtype(out_dtype).itemsize
    sub_in = _sublane_multiple(in_dtype)
    sub_out = _sublane_multiple(out_dtype)

    def working_set(tb, ti, tc):
        # VMEM tiles pad the minor dim to 128 lanes and the second-minor dim
        # to the dtype's sublane multiple; count the padded (physical) bytes.
        d_blk = tb * _round_up(ti, sub_in) * _round_up(tc, 128) * in_item
        p_blk = tb * sub_in * _round_up(tc, 128) * in_item
        beta_blk = tb * sub_in * _round_up(ti, 128) * in_item
        out_blk = tb * sub_out * _round_up(ti, 128) * out_item
        acc_blk = tb * 8 * _round_up(ti, 128) * 4
        return 2 * (d_blk + p_blk + beta_blk + out_blk) + acc_blk  # double-buffered

    ti_min = I if I < 128 else 128
    # Keep the whole concept axis in one block unless that alone blows VMEM;
    # only then tile it (lane-dense multiples of 128) with an accumulator.
    tc = C
    if C > 128 and working_set(1, ti_min, C) > budget:
        tc = 128
        while tc + 128 <= C and working_set(1, ti_min, tc + 128) <= budget:
            tc += 128

    tb = min(B, 8)
    ti = I if I < 128 else min(_round_up(I, 128), 2048)   # lane-dense item tile
    while ti > 128 and working_set(tb, ti, tc) > budget:
        ti -= 128
    while tb < min(B, 64) and working_set(min(B, tb * 2), ti, tc) <= budget:
        tb = min(B, tb * 2)

    # Avoid collapsing the parallel (batch, item) grid to a single step so
    # megacore can shard across v7x's two TensorCores.
    if -(-B // tb) * -(-I // ti) == 1:
        if I > 128:
            ti = _round_up(-(-I // 2), 128)
        elif B > 1:
            tb = -(-B // 2)

    return tb, ti, tc, vmem_limit


def mirt_kernel(d_ref, p_ref, beta_ref, o_ref, acc_ref, *, c_total, tc, use_mxu):
    # d_ref:    (tb, ti, tc)  item discriminations
    # p_ref:    (tb, 1,  tc)  learner proficiencies
    # beta_ref: (tb, 1,  ti)  item difficulties
    # o_ref:    (tb, 1,  ti)  output probabilities
    # acc_ref:  (tb, 1,  ti)  f32 accumulator over concept blocks
    k = pl.program_id(2)

    @pl.when(k == 0)
    def _init():
        acc_ref[...] = jnp.zeros_like(acc_ref)

    d = d_ref[...]
    p = p_ref[...]

    if c_total % tc != 0:
        # Ragged final concept block: zero the out-of-range tail of both
        # operands so stale VMEM contents cannot pollute valid outputs.
        c0 = k * tc
        lane = jax.lax.broadcasted_iota(jnp.int32, (1, 1, tc), 2)
        valid = (c0 + lane) < c_total
        d = jnp.where(valid, d, jnp.zeros((), d.dtype))
        p = jnp.where(valid, p, jnp.zeros((), p.dtype))

    if use_mxu:
        # einsum('bqc,bkc->bqk') with q == 1  ==  einsum('bic,bc->bi').
        # Runs on the MXU with an f32 accumulator; bf16 inputs stay bf16.
        prec = (jax.lax.Precision.HIGHEST
                if jnp.dtype(d.dtype) == jnp.float32 else None)
        acc_ref[...] += jax.lax.dot_general(
            p, d,
            dimension_numbers=(((2,), (2,)), ((0,), (0,))),
            precision=prec,
            preferred_element_type=jnp.float32)
    else:
        # VPU fallback: elementwise multiply + reduce over the concept axis.
        acc_ref[...] += jnp.sum(d * p, axis=-1, dtype=jnp.float32)[:, None, :]

    @pl.when(k == pl.num_programs(2) - 1)
    def _finalize():
        z = acc_ref[...] + beta_ref[...].astype(jnp.float32)
        o_ref[...] = jax.nn.sigmoid(z).astype(o_ref.dtype)


@functools.partial(jax.jit,
                   static_argnames=("tb", "ti", "tc", "vmem_limit", "use_mxu"))
def _mirt_call(p_lrn, d_scn, beta_scn, *, tb, ti, tc, vmem_limit, use_mxu):
    B, I, C = d_scn.shape
    # Free (metadata-only) reshapes so every kernel tile keeps the item axis
    # on lanes and no in-kernel relayout is needed.
    p3 = p_lrn.reshape(B, 1, C)
    beta3 = beta_scn.reshape(B, 1, I)

    grid = (pl.cdiv(B, tb), pl.cdiv(I, ti), pl.cdiv(C, tc))
    in_item = jnp.dtype(d_scn.dtype).itemsize

    out3 = pl.pallas_call(
        functools.partial(mirt_kernel, c_total=C, tc=tc, use_mxu=use_mxu),
        out_shape=jax.ShapeDtypeStruct((B, 1, I), d_scn.dtype),
        grid=grid,
        in_specs=[
            pl.BlockSpec((tb, ti, tc), lambda b, i, k: (b, i, k)),   # d_scn
            pl.BlockSpec((tb, 1, tc), lambda b, i, k: (b, 0, k)),    # p_lrn
            pl.BlockSpec((tb, 1, ti), lambda b, i, k: (b, 0, i)),    # beta_scn
        ],
        out_specs=pl.BlockSpec((tb, 1, ti), lambda b, i, k: (b, 0, i)),
        scratch_shapes=[pltpu.VMEM((tb, 1, ti), jnp.float32)],
        compiler_params=pltpu.CompilerParams(
            dimension_semantics=("parallel", "parallel", "arbitrary"),
            vmem_limit_bytes=vmem_limit,
        ),
        cost_estimate=pl.CostEstimate(
            flops=2 * B * I * C,
            transcendentals=B * I,
            bytes_accessed=(B * I * C + B * C + 2 * B * I) * in_item,
        ),
    )(d_scn, p3, beta3)

    return out3.reshape(B, I)


# If the batched-matmul formulation ever fails to lower on a given runtime we
# fall back (once) to a VPU multiply+reduce kernel with identical semantics.
_MXU_PATH_OK = [True]


def mirt_forward(p_lrn, d_scn, beta_scn, *, tb=None, ti=None, tc=None):
    B, I, C = d_scn.shape
    assert p_lrn.shape == (B, C)
    assert beta_scn.shape == (B, I)

    auto_tb, auto_ti, auto_tc, vmem_limit = _choose_tiles(
        B, I, C, d_scn.dtype, d_scn.dtype)
    tb = auto_tb if tb is None else tb
    ti = auto_ti if ti is None else ti
    tc = auto_tc if tc is None else tc
    kwargs = dict(tb=tb, ti=ti, tc=tc, vmem_limit=vmem_limit)

    if _MXU_PATH_OK[0]:
        try:
            return _mirt_call(p_lrn, d_scn, beta_scn, use_mxu=True, **kwargs)
        except Exception:
            _MXU_PATH_OK[0] = False
    return _mirt_call(p_lrn, d_scn, beta_scn, use_mxu=False, **kwargs)


def mirt_reference(p_lrn, d_scn, beta_scn):
    return jax.nn.sigmoid(jnp.einsum('bic,bc->bi', d_scn, p_lrn) + beta_scn)


if __name__ == "__main__":
    key = jax.random.PRNGKey(0)
    keys = jax.random.split(key, 9)

    # --- Test 1: spec-sized toy shapes (batch=2, items=8, concepts=32), f32.
    B, I, C = 2, 8, 32
    p_lrn = jax.random.normal(keys[0], (B, C), dtype=jnp.float32)
    d_scn = jax.random.normal(keys[1], (B, I, C), dtype=jnp.float32)
    beta_scn = jax.random.normal(keys[2], (B, I), dtype=jnp.float32)

    out = jax.block_until_ready(mirt_forward(p_lrn, d_scn, beta_scn))
    ref = mirt_reference(p_lrn, d_scn, beta_scn)
    assert out.shape == (B, I)
    # Tolerance covers MXU bf16-pass rounding on any TPU generation.
    assert jnp.allclose(out, ref, atol=2e-2, rtol=0), "mismatch (toy)"

    # --- Test 2: ragged B and I with explicit small tiles -> grid (3, 3, 1),
    # exercising the no-pad edge-block masking path.
    B2, I2, C2 = 20, 300, 48
    p2 = jax.random.normal(keys[3], (B2, C2), dtype=jnp.float32)
    d2 = jax.random.normal(keys[4], (B2, I2, C2), dtype=jnp.float32)
    b2 = jax.random.normal(keys[5], (B2, I2), dtype=jnp.float32)

    out2 = jax.block_until_ready(mirt_forward(p2, d2, b2, tb=8, ti=128))
    ref2 = mirt_reference(p2, d2, b2)
    assert out2.shape == (B2, I2)
    assert jnp.allclose(out2, ref2, atol=2e-2, rtol=0), "mismatch (ragged B/I)"

    # --- Test 3: ragged concept axis (C=200, tc=128) -> accumulator grid axis
    # plus in-kernel masking of the contraction tail.
    B3, I3, C3 = 16, 256, 200
    p3_ = jax.random.normal(keys[6], (B3, C3), dtype=jnp.float32)
    d3_ = jax.random.normal(keys[7], (B3, I3, C3), dtype=jnp.float32)
    b3_ = jax.random.normal(keys[8], (B3, I3), dtype=jnp.float32)

    out3 = jax.block_until_ready(mirt_forward(p3_, d3_, b3_, tb=8, ti=128, tc=128))
    ref3 = mirt_reference(p3_, d3_, b3_)
    assert jnp.allclose(out3, ref3, atol=2e-2, rtol=0), "mismatch (ragged C)"

    # --- Test 4: bf16 inputs (halves d_scn HBM traffic; bf16 fed natively to
    # the MXU with f32 accumulation).
    out4 = jax.block_until_ready(
        mirt_forward(p2.astype(jnp.bfloat16), d2.astype(jnp.bfloat16),
                     b2.astype(jnp.bfloat16)))
    assert jnp.allclose(out4.astype(jnp.float32), ref2, atol=3e-2, rtol=0), \
        "mismatch (bf16)"

    print("KERNEL_OK")
</pallas_src>

<mosaic_0001>
module attributes {stable_mosaic.version = 11 : i64} {
  func.func @mirt_kernel(%arg0: i32, %arg1: i32, %arg2: i32, %arg3: memref<1x8x32xf32, #tpu.memory_space<vmem>>, %arg4: memref<1x1x32xf32, #tpu.memory_space<vmem>>, %arg5: memref<1x1x8xf32, #tpu.memory_space<vmem>>, %arg6: memref<1x1x8xf32, #tpu.memory_space<vmem>>, %arg7: memref<1x1x8xf32, #tpu.memory_space<vmem>>) attributes {dimension_semantics = [#tpu.dimension_semantics<parallel>, #tpu.dimension_semantics<parallel>, #tpu.dimension_semantics<arbitrary>], iteration_bounds = array<i64: 2, 1, 1>, scalar_prefetch = 0 : i64, scratch_operands = 1 : i64, tpu.core_type = #tpu.core_type<tc>, window_params = [{transform_indices = @transform_0, window_bounds = array<i64: 1, 8, 32>}, {transform_indices = @transform_1, window_bounds = array<i64: 1, 1, 32>}, {transform_indices = @transform_2, window_bounds = array<i64: 1, 1, 8>}, {transform_indices = @transform_3, window_bounds = array<i64: 1, 1, 8>}]} {
    %c0_i32 = arith.constant 0 : i32
    %0 = arith.cmpi eq, %arg2, %c0_i32 : i32
    %1 = arith.extui %0 : i1 to i32
    %c0_i32_0 = arith.constant 0 : i32
    %2 = arith.cmpi ne, %1, %c0_i32_0 : i32
    scf.if %2 {
      %cst_14 = arith.constant 0.000000e+00 : f32
      %12 = vector.broadcast %cst_14 : f32 to vector<1x1x8xf32>
      %c0_15 = arith.constant 0 : index
      %c0_16 = arith.constant 0 : index
      %c0_17 = arith.constant 0 : index
      %13 = vector.load %arg7[%c0_15, %c0_16, %c0_17] : memref<1x1x8xf32, #tpu.memory_space<vmem>>, vector<1x1x8xf32>
      tpu.vector_store %arg7[%c0_15, %c0_16, %c0_17], %12 {strides = array<i32>} : memref<1x1x8xf32, #tpu.memory_space<vmem>>, vector<1x1x8xf32>,
    } else {
    }
    %c0 = arith.constant 0 : index
    %c0_1 = arith.constant 0 : index
    %c0_2 = arith.constant 0 : index
    %3 = vector.load %arg3[%c0, %c0_1, %c0_2] : memref<1x8x32xf32, #tpu.memory_space<vmem>>, vector<1x8x32xf32>
    %c0_3 = arith.constant 0 : index
    %c0_4 = arith.constant 0 : index
    %c0_5 = arith.constant 0 : index
    %4 = vector.load %arg4[%c0_3, %c0_4, %c0_5] : memref<1x1x32xf32, #tpu.memory_space<vmem>>, vector<1x1x32xf32>
    %c0_6 = arith.constant 0 : index
    %c0_7 = arith.constant 0 : index
    %c0_8 = arith.constant 0 : index
    %5 = vector.load %arg7[%c0_6, %c0_7, %c0_8] : memref<1x1x8xf32, #tpu.memory_space<vmem>>, vector<1x1x8xf32>
    %cst = arith.constant dense<0.000000e+00> : vector<1x1x8xf32>
    %6 = tpu.matmul %4, %3, %cst {dimension_numbers = #tpu.dot_dimension_numbers<[2], [2], [1], [1], [0, 0, 0, 1, 1, 1], [0], [0]>, precision = #tpu.contract_precision<fp32>} : vector<1x1x32xf32>, vector<1x8x32xf32>, vector<1x1x8xf32> -> vector<1x1x8xf32>
    %7 = arith.addf %5, %6 : vector<1x1x8xf32>
    %c0_9 = arith.constant 0 : index
    %c0_10 = arith.constant 0 : index
    %c0_11 = arith.constant 0 : index
    %8 = vector.load %arg7[%c0_9, %c0_10, %c0_11] : memref<1x1x8xf32, #tpu.memory_space<vmem>>, vector<1x1x8xf32>
    tpu.vector_store %arg7[%c0_9, %c0_10, %c0_11], %7 {strides = array<i32>} : memref<1x1x8xf32, #tpu.memory_space<vmem>>, vector<1x1x8xf32>,
    %c0_i32_12 = arith.constant 0 : i32
    %9 = arith.cmpi eq, %arg2, %c0_i32_12 : i32
    %10 = arith.extui %9 : i1 to i32
    %c0_i32_13 = arith.constant 0 : i32
    %11 = arith.cmpi ne, %10, %c0_i32_13 : i32
    scf.if %11 {
      %c0_14 = arith.constant 0 : index
      %c0_15 = arith.constant 0 : index
      %c0_16 = arith.constant 0 : index
      %12 = vector.load %arg7[%c0_14, %c0_15, %c0_16] : memref<1x1x8xf32, #tpu.memory_space<vmem>>, vector<1x1x8xf32>
      %c0_17 = arith.constant 0 : index
      %c0_18 = arith.constant 0 : index
      %c0_19 = arith.constant 0 : index
      %13 = vector.load %arg5[%c0_17, %c0_18, %c0_19] : memref<1x1x8xf32, #tpu.memory_space<vmem>>, vector<1x1x8xf32>
      %14 = arith.addf %12, %13 : vector<1x1x8xf32>
      %15 = arith.negf %14 : vector<1x1x8xf32>
      %16 = math.exp %15 : vector<1x1x8xf32>
      %cst_20 = arith.constant 1.000000e+00 : f32
      %17 = vector.broadcast %cst_20 : f32 to vector<1x1x8xf32>
      %18 = arith.addf %17, %16 : vector<1x1x8xf32>
      %19 = arith.divf %17, %18 : vector<1x1x8xf32>
      %c0_21 = arith.constant 0 : index
      %c0_22 = arith.constant 0 : index
      %c0_23 = arith.constant 0 : index
      %20 = vector.load %arg6[%c0_21, %c0_22, %c0_23] : memref<1x1x8xf32, #tpu.memory_space<vmem>>, vector<1x1x8xf32>
      tpu.vector_store %arg6[%c0_21, %c0_22, %c0_23], %19 {strides = array<i32>} : memref<1x1x8xf32, #tpu.memory_space<vmem>>, vector<1x1x8xf32>,
    } else {
    }
    return
  }
  func.func @transform_0(%arg0: i32, %arg1: i32, %arg2: i32) -> (i32, i32, i32) {
    %c0_i32 = arith.constant 0 : i32
    return %arg0, %arg1, %arg2 : i32, i32, i32
  }
  func.func @transform_1(%arg0: i32, %arg1: i32, %arg2: i32) -> (i32, i32, i32) {
    %c0_i32 = arith.constant 0 : i32
    %c0_i32_0 = arith.constant 0 : i32
    return %arg0, %c0_i32, %arg2 : i32, i32, i32
  }
  func.func @transform_2(%arg0: i32, %arg1: i32, %arg2: i32) -> (i32, i32, i32) {
    %c0_i32 = arith.constant 0 : i32
    %c0_i32_0 = arith.constant 0 : i32
    return %arg0, %c0_i32, %arg1 : i32, i32, i32
  }
  func.func @transform_3(%arg0: i32, %arg1: i32, %arg2: i32) -> (i32, i32, i32) {
    %c0_i32 = arith.constant 0 : i32
    %c0_i32_0 = arith.constant 0 : i32
    return %arg0, %c0_i32, %arg1 : i32, i32, i32
  }
}

module attributes {stable_mosaic.version = 11 : i64} {
  func.func @mirt_kernel(%arg0: i32, %arg1: i32, %arg2: i32, %arg3: memref<1x8x32xf32, #tpu.memory_space<vmem>>, %arg4: memref<1x1x32xf32, #tpu.memory_space<vmem>>, %arg5: memref<1x1x8xf32, #tpu.memory_space<vmem>>, %arg6: memref<1x1x8xf32, #tpu.memory_space<vmem>>, %arg7: memref<1x1x8xf32, #tpu.memory_space<vmem>>) attributes {dimension_semantics = [#tpu.dimension_semantics<parallel>, #tpu.dimension_semantics<parallel>, #tpu.dimension_semantics<arbitrary>], iteration_bounds = array<i64: 2, 1, 1>, scalar_prefetch = 0 : i64, scratch_operands = 1 : i64, tpu.core_type = #tpu.core_type<tc>, window_params = [{transform_indices = @transform_0, window_bounds = array<i64: 1, 8, 32>}, {transform_indices = @transform_1, window_bounds = array<i64: 1, 1, 32>}, {transform_indices = @transform_2, window_bounds = array<i64: 1, 1, 8>}, {transform_indices = @transform_3, window_bounds = array<i64: 1, 1, 8>}]} {
    %c0_i32 = arith.constant 0 : i32
    %0 = arith.cmpi eq, %arg2, %c0_i32 : i32
    %1 = arith.extui %0 : i1 to i32
    %c0_i32_0 = arith.constant 0 : i32
    %2 = arith.cmpi ne, %1, %c0_i32_0 : i32
    scf.if %2 {
      %cst_14 = arith.constant 0.000000e+00 : f32
      %15 = vector.broadcast %cst_14 : f32 to vector<1x1x8xf32>
      %c0_15 = arith.constant 0 : index
      %c0_16 = arith.constant 0 : index
      %c0_17 = arith.constant 0 : index
      %16 = vector.load %arg7[%c0_15, %c0_16, %c0_17] : memref<1x1x8xf32, #tpu.memory_space<vmem>>, vector<1x1x8xf32>
      tpu.vector_store %arg7[%c0_15, %c0_16, %c0_17], %15 {strides = array<i32>} : memref<1x1x8xf32, #tpu.memory_space<vmem>>, vector<1x1x8xf32>,
    } else {
    }
    %c0 = arith.constant 0 : index
    %c0_1 = arith.constant 0 : index
    %c0_2 = arith.constant 0 : index
    %3 = vector.load %arg3[%c0, %c0_1, %c0_2] : memref<1x8x32xf32, #tpu.memory_space<vmem>>, vector<1x8x32xf32>
    %c0_3 = arith.constant 0 : index
    %c0_4 = arith.constant 0 : index
    %c0_5 = arith.constant 0 : index
    %4 = vector.load %arg4[%c0_3, %c0_4, %c0_5] : memref<1x1x32xf32, #tpu.memory_space<vmem>>, vector<1x1x32xf32>
    %c0_6 = arith.constant 0 : index
    %c0_7 = arith.constant 0 : index
    %c0_8 = arith.constant 0 : index
    %5 = vector.load %arg7[%c0_6, %c0_7, %c0_8] : memref<1x1x8xf32, #tpu.memory_space<vmem>>, vector<1x1x8xf32>
    %6 = vector.broadcast %4 : vector<1x1x32xf32> to vector<1x8x32xf32>
    %7 = arith.mulf %3, %6 : vector<1x8x32xf32>
    %cst = arith.constant dense<0.000000e+00> : vector<1x8xf32>
    %8 = vector.multi_reduction <add>, %7, %cst [2] : vector<1x8x32xf32> to vector<1x8xf32>
    %9 = vector.shape_cast %8 : vector<1x8xf32> to vector<1x1x8xf32>
    %10 = arith.addf %5, %9 : vector<1x1x8xf32>
    %c0_9 = arith.constant 0 : index
    %c0_10 = arith.constant 0 : index
    %c0_11 = arith.constant 0 : index
    %11 = vector.load %arg7[%c0_9, %c0_10, %c0_11] : memref<1x1x8xf32, #tpu.memory_space<vmem>>, vector<1x1x8xf32>
    tpu.vector_store %arg7[%c0_9, %c0_10, %c0_11], %10 {strides = array<i32>} : memref<1x1x8xf32, #tpu.memory_space<vmem>>, vector<1x1x8xf32>,
    %c0_i32_12 = arith.constant 0 : i32
    %12 = arith.cmpi eq, %arg2, %c0_i32_12 : i32
    %13 = arith.extui %12 : i1 to i32
    %c0_i32_13 = arith.constant 0 : i32
    %14 = arith.cmpi ne, %13, %c0_i32_13 : i32
    scf.if %14 {
      %c0_14 = arith.constant 0 : index
      %c0_15 = arith.constant 0 : index
      %c0_16 = arith.constant 0 : index
      %15 = vector.load %arg7[%c0_14, %c0_15, %c0_16] : memref<1x1x8xf32, #tpu.memory_space<vmem>>, vector<1x1x8xf32>
      %c0_17 = arith.constant 0 : index
      %c0_18 = arith.constant 0 : index
      %c0_19 = arith.constant 0 : index
      %16 = vector.load %arg5[%c0_17, %c0_18, %c0_19] : memref<1x1x8xf32, #tpu.memory_space<vmem>>, vector<1x1x8xf32>
      %17 = arith.addf %15, %16 : vector<1x1x8xf32>
      %18 = arith.negf %17 : vector<1x1x8xf32>
      %19 = math.exp %18 : vector<1x1x8xf32>
      %cst_20 = arith.constant 1.000000e+00 : f32
      %20 = vector.broadcast %cst_20 : f32 to vector<1x1x8xf32>
      %21 = arith.addf %20, %19 : vector<1x1x8xf32>
      %22 = arith.divf %20, %21 : vector<1x1x8xf32>
      %c0_21 = arith.constant 0 : index
      %c0_22 = arith.constant 0 : index
      %c0_23 = arith.constant 0 : index
      %23 = vector.load %arg6[%c0_21, %c0_22, %c0_23] : memref<1x1x8xf32, #tpu.memory_space<vmem>>, vector<1x1x8xf32>
      tpu.vector_store %arg6[%c0_21, %c0_22, %c0_23], %22 {strides = array<i32>} : memref<1x1x8xf32, #tpu.memory_space<vmem>>, vector<1x1x8xf32>,
    } else {
    }
    return
  }
  func.func @transform_0(%arg0: i32, %arg1: i32, %arg2: i32) -> (i32, i32, i32) {
    %c0_i32 = arith.constant 0 : i32
    return %arg0, %arg1, %arg2 : i32, i32, i32
  }
  func.func @transform_1(%arg0: i32, %arg1: i32, %arg2: i32) -> (i32, i32, i32) {
    %c0_i32 = arith.constant 0 : i32
    %c0_i32_0 = arith.constant 0 : i32
    return %arg0, %c0_i32, %arg2 : i32, i32, i32
  }
  func.func @transform_2(%arg0: i32, %arg1: i32, %arg2: i32) -> (i32, i32, i32) {
    %c0_i32 = arith.constant 0 : i32
    %c0_i32_0 = arith.constant 0 : i32
    return %arg0, %c0_i32, %arg1 : i32, i32, i32
  }
  func.func @transform_3(%arg0: i32, %arg1: i32, %arg2: i32) -> (i32, i32, i32) {
    %c0_i32 = arith.constant 0 : i32
    %c0_i32_0 = arith.constant 0 : i32
    return %arg0, %c0_i32, %arg1 : i32, i32, i32
  }
}

</mosaic_0001>

<llo_original>
// kernel: _mirt_call.1
$region0: #{_mirt_call.1}
  #allocation0 [shape = 'u32[]', space=smem, size = 0x4, offset = 0x4, fixed_abs, tag = 'smem constant byte address 0x4 - core index']
  #allocation1 [shape = 'u32[144,128]{1,0:T(1,128)}', space=vmem, size = 0x12000, scoped, tag = 'internal scratch']
  #allocation2 [shape = 'f32[1,1,8]{2,1,0:T(1,128)}', space=vmem, size = 0x200, scoped, tag = 'scratch operand']
  %s0 = inlined_call_operand.hbm [shape: f32[2,8,32], index: 0, kind: input, shape index: {}]
  %s1 = inlined_call_operand.vmem [shape: f32[2,1,32], index: 1, kind: input, shape index: {}]
  %s2 = inlined_call_operand.vmem [shape: f32[2,1,8], index: 2, kind: input, shape index: {}]
  %s3 = inlined_call_operand.hbm [shape: f32[2,1,8], index: 3, kind: output, shape index: {}]
  %s4 = sld [smem:[#allocation0]]
  $region57: #{_mirt_call.1} parent=0
    _
  %s6 = ssub.s32 1, %s4
  %s7 = scalar_select 0, %s6, %s4
  $region1: #{_mirt_call.1} parent=0
    #allocation3 [shape = 'u8[8192]{0}', space=vmem, size = 0x2000, scoped, tag = 'input window, operand 0']
    #allocation4 [shape = 's32[2]{0}', space=sflag, size = 0x8, scoped, tag = 'scoped memory for _mirt_call.1']
    #allocation5 [shape = 's32[2]{0}', space=sflag, size = 0x8, scoped, tag = 'scoped memory for _mirt_call.1']
    #allocation6 [shape = 'u8[1024]{0}', space=vmem, size = 0x400, scoped, tag = 'output window, operand 0']
    %8 = vsyncpa [#allocation4], 0
    %s9 = scalar_lea.sflag [#allocation4], 1
    %10 = vsyncpa %s9, 0
    %11 = vsyncpa [#allocation5], 0
    %s12 = scalar_lea.sflag [#allocation5], 1
    %13 = vsyncpa %s12, 0
    loop: start=0, step=1, limit=4
    $region2: #{_mirt_call.1} parent=1 // loop_pre_header
      _
    $region3: #{_mirt_call.1} parent=1 // loop_header
      %s15 = sphi 0, %s19
      %p16 = scmp.ge.s32.totalorder %s15, 4
      %s22 = sphi 0, %s41
      %s23 = sphi 0, %s37
      %s24 = sphi 0, %s33
      %s25 = sphi 0, %s22
      %s26 = sphi 0, %s23
      %s27 = sphi 0, %s24
      %s28 = sphi 0, %s25
      %s29 = sphi 0, %s26
      %s30 = sphi 0, %s27
      %s48 = sphi 0, %s50
      %s51 = sphi 0, %s48
      %s52 = sphi 0, %s51
      %s68 = sphi 0, %s52
      %s76 = sphi 0, %s78
      %s79 = sphi 0, %s76
      %s80 = sphi 0, %s79
      %s96 = sphi 0, %s80
      %s104 = sphi 0, %s106
      %s107 = sphi 0, %s104
      %s108 = sphi 0, %s107
      %s124 = sphi 0, %s108
      %s132 = sphi 0, %s134
      %s135 = sphi 0, %s132
      %s136 = sphi 0, %s135
      %s152 = sphi 0, %s136
    $region4: #{_mirt_call.1} parent=1 // loop_header_branch
      %18 = sbr.rel (%p16) target = $region8
    $region5: #{_mirt_call.1} parent=1 // loop_body
      %s20 = ssub.s32 %s15, 1
      %s21 = ssub.s32 %s15, 2
      %s31 = sadd.s32 1, %s24
      %p32 = scmp.ge.s32.totalorder %s31, 1
      %s33 = scalar_select %p32, 0, %s31
      %s34 = sadd.s32 1, %s23
      %s35 = scalar_select %p32, %s34, %s23
      %p36 = scmp.ge.s32.totalorder %s35, 1
      %s37 = scalar_select %p36, 0, %s35
      %s38 = sadd.s32 1, %s22
      %s39 = scalar_select %p36, %s38, %s22
      %p40 = scmp.ge.s32.totalorder %s39, 2
      %s41 = scalar_select %p40, 0, %s39
      %s42 = ssub.s32 %s22, %s41
      %s43 = ssub.s32 %s23, %s37
      %s44 = sor.u32 %s42, %s43
      %s45 = ssub.s32 %s24, %s33
      %s46 = sor.u32 %s44, %s45
      %p47 = scmp.eq.s32.totalorder %s46, 0
      %s49 = sadd.s32 %s48, 1
      %s50 = scalar_select %p47, %s48, %s49
      %p53 = pneg %p47
      %p54 = scmp.eq.s32.totalorder %s15, 1
      %p55 = por %p53, %p54
      %p56 = scmp.ne.s32.totalorder %s48, %s51
      %p57 = scmp.eq.s32.totalorder %s15, 0
      %p58 = por %p56, %p57
      %p59 = scmp.ne.s32.totalorder %s48, %s51
      %p60 = scmp.eq.s32.totalorder %s20, 1
      %p61 = por %p59, %p60
      %p62 = scmp.ne.s32.totalorder %s51, %s52
      %p63 = scmp.eq.s32.totalorder %s20, 0
      %p64 = por %p62, %p63
      %p65 = scmp.ne.s32.totalorder %s51, %s52
      %p66 = scmp.eq.s32.totalorder %s21, 1
      %p67 = por %p65, %p66
      %p69 = scmp.ne.s32.totalorder %s52, %s68
      %p70 = scmp.eq.s32.totalorder %s21, 0
      %p71 = por %p69, %p70
      %s72 = ssub.s32 %s22, %s41
      %s73 = ssub.s32 %s24, %s33
      %s74 = sor.u32 %s72, %s73
      %p75 = scmp.eq.s32.totalorder %s74, 0
      %s77 = sadd.s32 %s76, 1
      %s78 = scalar_select %p75, %s76, %s77
      %p81 = pneg %p75
      %p82 = scmp.eq.s32.totalorder %s15, 1
      %p83 = por %p81, %p82
      %p84 = scmp.ne.s32.totalorder %s76, %s79
      %p85 = scmp.eq.s32.totalorder %s15, 0
      %p86 = por %p84, %p85
      %p87 = scmp.ne.s32.totalorder %s76, %s79
      %p88 = scmp.eq.s32.totalorder %s20, 1
      %p89 = por %p87, %p88
      %p90 = scmp.ne.s32.totalorder %s79, %s80
      %p91 = scmp.eq.s32.totalorder %s20, 0
      %p92 = por %p90, %p91
      %p93 = scmp.ne.s32.totalorder %s79, %s80
      %p94 = scmp.eq.s32.totalorder %s21, 1
      %p95 = por %p93, %p94
      %p97 = scmp.ne.s32.totalorder %s80, %s96
      %p98 = scmp.eq.s32.totalorder %s21, 0
      %p99 = por %p97, %p98
      %s100 = ssub.s32 %s22, %s41
      %s101 = ssub.s32 %s23, %s37
      %s102 = sor.u32 %s100, %s101
      %p103 = scmp.eq.s32.totalorder %s102, 0
      %s105 = sadd.s32 %s104, 1
      %s106 = scalar_select %p103, %s104, %s105
      %p109 = pneg %p103
      %p110 = scmp.eq.s32.totalorder %s15, 1
      %p111 = por %p109, %p110
      %p112 = scmp.ne.s32.totalorder %s104, %s107
      %p113 = scmp.eq.s32.totalorder %s15, 0
      %p114 = por %p112, %p113
      %p115 = scmp.ne.s32.totalorder %s104, %s107
      %p116 = scmp.eq.s32.totalorder %s20, 1
      %p117 = por %p115, %p116
      %p118 = scmp.ne.s32.totalorder %s107, %s108
      %p119 = scmp.eq.s32.totalorder %s20, 0
      %p120 = por %p118, %p119
      %p121 = scmp.ne.s32.totalorder %s107, %s108
      %p122 = scmp.eq.s32.totalorder %s21, 1
      %p123 = por %p121, %p122
      %p125 = scmp.ne.s32.totalorder %s108, %s124
      %p126 = scmp.eq.s32.totalorder %s21, 0
      %p127 = por %p125, %p126
      %s128 = ssub.s32 %s22, %s41
      %s129 = ssub.s32 %s23, %s37
      %s130 = sor.u32 %s128, %s129
      %p131 = scmp.eq.s32.totalorder %s130, 0
      %s133 = sadd.s32 %s132, 1
      %s134 = scalar_select %p131, %s132, %s133
      %p137 = pneg %p131
      %p138 = scmp.eq.s32.totalorder %s15, 1
      %p139 = por %p137, %p138
      %p140 = scmp.ne.s32.totalorder %s132, %s135
      %p141 = scmp.eq.s32.totalorder %s15, 0
      %p142 = por %p140, %p141
      %p143 = scmp.ne.s32.totalorder %s132, %s135
      %p144 = scmp.eq.s32.totalorder %s20, 1
      %p145 = por %p143, %p144
      %p146 = scmp.ne.s32.totalorder %s135, %s136
      %p147 = scmp.eq.s32.totalorder %s20, 0
      %p148 = por %p146, %p147
      %p149 = scmp.ne.s32.totalorder %s135, %s136
      %p150 = scmp.eq.s32.totalorder %s21, 1
      %p151 = por %p149, %p150
      %p153 = scmp.ne.s32.totalorder %s136, %s152
      %p154 = scmp.eq.s32.totalorder %s21, 0
      %p155 = por %p153, %p154
      %p156 = scmp.le.s32.totalorder 1, %s15
      %p157 = scmp.lt.s32.totalorder %s15, 3
      %p158 = pnand %p156, %p157
      %p159 = pneg %p158
      // Predicated region
      $region9: #{_mirt_call.1} parent=5 // pred_check
        _
      $region10: #{_mirt_call.1} parent=5 // pred_check_branch
        %161 = sbr.rel (%p158) target = $region12
      $region11: #{_mirt_call.1} parent=5 // pred_region
        %s162 = ssub.s32 %s15, 1
      $region12: #{_mirt_call.1} parent=5 // pred_fallthru
        _
      %p163 = scmp.lt.s32.totalorder %s15, 2
      // Predicated region
      $region13: #{_mirt_call.1} parent=5 // pred_check
        %p164 = pneg %p163
      $region14: #{_mirt_call.1} parent=5 // pred_check_branch
        %166 = sbr.rel (%p164) target = $region16
      $region15: #{_mirt_call.1} parent=5 // pred_region
        // Predicated region
        $region17: #{_mirt_call.1} parent=15 // pred_check
          %p167 = pneg %p58
        $region18: #{_mirt_call.1} parent=15 // pred_check_branch
          %169 = sbr.rel (%p167) target = $region20
        $region19: #{_mirt_call.1} parent=15 // pred_region
          %s170 = sand.u32 %s48, 1
          %s171 = scalar_lea.sflag [#allocation4], %s170
          %s172 = sand.u32 %s48, 1
          %s173 = smul.addr %s172, 8
          %s174 = scalar_lea.vmem [#allocation3], %s173
          %s176 = ssub.s32 128, 128
          %177 = vsyncadd %s171, %s176
          %s178 = sadd.s32 %s24, %s23
          %s179 = sadd.s32 %s178, %s22
          %s180 = smul.addr %s179, 128
          %s181 = scalar_lea.hbm %s0, %s180
          %s183 = sshll.u32 %s174, 4
          %s184 = int_to_ptr.vmem [resolvable:$true] %s183
          %186 = dma.hbm_to_vmem [thread:$0]  %s181, 128, %s184, %s171
        $region20: #{_mirt_call.1} parent=15 // pred_fallthru
          _
        // Predicated region
        $region21: #{_mirt_call.1} parent=15 // pred_check
          %p187 = pneg %p86
        $region22: #{_mirt_call.1} parent=15 // pred_check_branch
          %189 = sbr.rel (%p187) target = $region24
        $region23: #{_mirt_call.1} parent=15 // pred_region
          %p190 = scmp.lt.s32.totalorder %s22, 1
          %s191 = scalar_select %p190, %s22, 1
          %p192 = scmp.lt.s32.totalorder %s24, 0
          %s193 = scalar_select %p192, %s24, 0
          %s194 = sadd.s32 %s193, %s191
          %s195 = scalar_lea.vmem %s1, %s194
        $region24: #{_mirt_call.1} parent=15 // pred_fallthru
          _
        // Predicated region
        $region25: #{_mirt_call.1} parent=15 // pred_check
          %p196 = pneg %p114
        $region26: #{_mirt_call.1} parent=15 // pred_check_branch
          %198 = sbr.rel (%p196) target = $region28
        $region27: #{_mirt_call.1} parent=15 // pred_region
          %p199 = scmp.lt.s32.totalorder %s22, 1
          %s200 = scalar_select %p199, %s22, 1
          %p201 = scmp.lt.s32.totalorder %s23, 0
          %s202 = scalar_select %p201, %s23, 0
          %s203 = sadd.s32 %s202, %s200
          %s204 = scalar_lea.vmem %s2, %s203
        $region28: #{_mirt_call.1} parent=15 // pred_fallthru
          _
      $region16: #{_mirt_call.1} parent=5 // pred_fallthru
        _
      %p205 = scmp.le.s32.totalorder 1, %s15
      %p206 = scmp.lt.s32.totalorder %s15, 3
      %p207 = pnand %p205, %p206
      %p208 = pneg %p207
      // Predicated region
      $region29: #{_mirt_call.1} parent=5 // pred_check
        _
      $region30: #{_mirt_call.1} parent=5 // pred_check_branch
        %210 = sbr.rel (%p207) target = $region32
      $region31: #{_mirt_call.1} parent=5 // pred_region
        %s211 = ssub.s32 %s15, 1
        %s212 = sand.u32 %s51, 1
        %s213 = scalar_lea.sflag [#allocation4], %s212
        %s214 = sand.u32 %s51, 1
        %s215 = smul.addr %s214, 8
        %s216 = scalar_lea.vmem [#allocation3], %s215
        // Predicated region
        $region33: #{_mirt_call.1} parent=31 // pred_check
          %p217 = pneg %p64
        $region34: #{_mirt_call.1} parent=31 // pred_check_branch
          %219 = sbr.rel (%p217) target = $region36
        $region35: #{_mirt_call.1} parent=31 // pred_region
          %220 = dma.done %s213, 128
        $region36: #{_mirt_call.1} parent=31 // pred_fallthru
          _
        %s221 = sand.u32 %s51, 1
        %s222 = scalar_lea.sflag [#allocation4], %s221
        %s223 = sand.u32 %s51, 1
        %s224 = smul.addr %s223, 8
        %s225 = scalar_lea.vmem [#allocation3], %s224
        %p226 = pneg %p64
        %p227 = pneg %p61
        %p228 = scmp.lt.s32.totalorder %s25, 1
        %s229 = scalar_select %p228, %s25, 1
        %p230 = scmp.lt.s32.totalorder %s27, 0
        %s231 = scalar_select %p230, %s27, 0
        %s232 = sadd.s32 %s231, %s229
        %s233 = scalar_lea.vmem %s1, %s232
        %p234 = pneg %p92
        %p235 = pneg %p89
        %p236 = scmp.lt.s32.totalorder %s25, 1
        %s237 = scalar_select %p236, %s25, 1
        %p238 = scmp.lt.s32.totalorder %s26, 0
        %s239 = scalar_select %p238, %s26, 0
        %s240 = sadd.s32 %s239, %s237
        %s241 = scalar_lea.vmem %s2, %s240
        %p242 = pneg %p120
        %p243 = pneg %p117
        %p244 = pneg %p148
        %p245 = pneg %p145
        %s246 = sand.u32 %s135, 1
        %s247 = scalar_lea.sflag [#allocation5], %s246
        %s248 = sand.u32 %s135, 1
        %s249 = scalar_lea.vmem [#allocation6], %s248
        %p250 = scmp.lt.s32.totalorder %s25, 1
        %s251 = scalar_select %p250, %s25, 1
        %p252 = scmp.lt.s32.totalorder %s27, 0
        %s253 = scalar_select %p252, %s27, 0
        %s254 = sadd.s32 %s253, %s251
        %s255 = scalar_lea.vmem %s1, %s254
        %p256 = scmp.lt.s32.totalorder %s25, 1
        %s257 = scalar_select %p256, %s25, 1
        %p258 = scmp.lt.s32.totalorder %s26, 0
        %s259 = scalar_select %p258, %s26, 0
        %s260 = sadd.s32 %s259, %s257
        %s261 = scalar_lea.vmem %s2, %s260
        %p262 = scmp.eq.s32.totalorder %s27, 0
        // Predicated region
        $region37: #{_mirt_call.1} parent=31 // pred_check
          %p263 = pneg %p262
        $region38: #{_mirt_call.1} parent=31 // pred_check_branch
          %265 = sbr.rel (%p263) target = $region40
        $region39: #{_mirt_call.1} parent=31 // pred_region
          %vm266 = vcmask 57344
          %267 = vst.msk [vmem:[#allocation2] sm:$0x1] %vm266, 0.0
        $region40: #{_mirt_call.1} parent=31 // pred_fallthru
          _
        %v268 = vld [vmem:[%s216] sm:$0xff]
        %v269 = vld [vmem:[%s255] sm:$0x1]
        %v270 = vld [vmem:[#allocation2] sm:$0x1]
        %vm271 = vcmask 261120
        %v273 = vsel %vm271, %v269, 0
        %v276 = vsel %vm271, %v268, 0
        %278 = vmatprep.subr.mxu0 0.0
        %279 = vmatpush1.xpose.msra.mxu0 0.0
        %280 = vmatprep.subr.mxu0 0.0
        %281 = vmatpush1.xpose.msra.mxu0 0.0
        %282 = vmatprep.subr.mxu0 0.0
        %283 = vmatpush1.xpose.msra.mxu0 0.0
        %284 = vmatprep.subr.mxu0 0.0
        %285 = vmatpush1.xpose.msra.mxu0 0.0
        %286 = vmatprep.subr.mxu0 0.0
        %287 = vmatpush1.xpose.msra.mxu0 0.0
        %288 = vmatprep.subr.mxu0 0.0
        %289 = vmatpush1.xpose.msra.mxu0 0.0
        %290 = vmatprep.subr.mxu0 0.0
        %291 = vmatpush1.xpose.msra.mxu0 0.0
        %292 = vmatprep.subr.mxu0 0.0
        %293 = vmatpush1.xpose.msra.mxu0 0.0
        %294 = vmatprep.subr.mxu0 0.0
        %295 = vmatpush1.xpose.msra.mxu0 0.0
        %296 = vmatprep.subr.mxu0 0.0
        %297 = vmatpush1.xpose.msra.mxu0 0.0
        %298 = vmatprep.subr.mxu0 0.0
        %299 = vmatpush1.xpose.msra.mxu0 0.0
        %300 = vmatprep.subr.mxu0 0.0
        %301 = vmatpush1.xpose.msra.mxu0 0.0
        %302 = vmatprep.subr.mxu0 0.0
        %303 = vmatpush1.xpose.msra.mxu0 0.0
        %304 = vmatprep.subr.mxu0 0.0
        %305 = vmatpush1.xpose.msra.mxu0 0.0
        %306 = vmatprep.subr.mxu0 0.0
        %307 = vmatpush1.xpose.msra.mxu0 0.0
        %308 = vmatprep.subr.mxu0 0.0
        %v309 = vand.u32 %v276, 4294901760
        %310 = vmatpush1.xpose.msra.mxu0 %v309
        %311 = vmatprep.subr.mxu0 0.0
        %312 = vmatpush2.xpose.msra.mxu0 0.0
        %313 = vmatprep.subr.mxu0 0.0
        %314 = vmatpush2.xpose.msra.mxu0 0.0
        %315 = vmatprep.subr.mxu0 0.0
        %316 = vmatpush2.xpose.msra.mxu0 0.0
        %317 = vmatprep.subr.mxu0 0.0
        %318 = vmatpush2.xpose.msra.mxu0 0.0
        %319 = vmatprep.subr.mxu0 0.0
        %320 = vmatpush2.xpose.msra.mxu0 0.0
        %321 = vmatprep.subr.mxu0 0.0
        %322 = vmatpush2.xpose.msra.mxu0 0.0
        %323 = vmatprep.subr.mxu0 0.0
        %324 = vmatpush2.xpose.msra.mxu0 0.0
        %325 = vmatprep.subr.mxu0 0.0
        %326 = vmatpush2.xpose.msra.mxu0 0.0
        %327 = vmatprep.subr.mxu0 0.0
        %328 = vmatpush2.xpose.msra.mxu0 0.0
        %329 = vmatprep.subr.mxu0 0.0
        %330 = vmatpush2.xpose.msra.mxu0 0.0
        %331 = vmatprep.subr.mxu0 0.0
        %332 = vmatpush2.xpose.msra.mxu0 0.0
        %333 = vmatprep.subr.mxu0 0.0
        %334 = vmatpush2.xpose.msra.mxu0 0.0
        %335 = vmatprep.subr.mxu0 0.0
        %336 = vmatpush2.xpose.msra.mxu0 0.0
        %337 = vmatprep.subr.mxu0 0.0
        %338 = vmatpush2.xpose.msra.mxu0 0.0
        %339 = vmatprep.subr.mxu0 0.0
        %340 = vmatpush2.xpose.msra.mxu0 0.0
        %341 = vmatprep.subr.mxu0 0.0
        %342 = vmatpush2.xpose.msra.mxu0 0.0
        %343 = vmatprep.mubr.f32.mxu0 0.0
        %v344 = vand.u32 %v273, 4294901760
        %v345 = vsub.f32 %v273, %v344
        %v346 = vand.u32 %v345, 4294901760
        %v347 = vsub.f32 %v345, %v346
        %v348 = vand.u32 %v347, 4294901760
        %349 = vmatmul.mubr.f32.gmra.mxu0 %v348
        %v350 = vpop.f32.mrf.mxu0
        %v351 = vadd.f32 0.0, %v350
        %v352 = vpop.f32.mrf.mxu0
        %353 = vdwg.mxu0
        %354 = vmatprep.subr.mxu0 0.0
        %355 = vmatpush1.xpose.msra.mxu0 0.0
        %356 = vmatprep.subr.mxu0 0.0
        %357 = vmatpush1.xpose.msra.mxu0 0.0
        %358 = vmatprep.subr.mxu0 0.0
        %359 = vmatpush1.xpose.msra.mxu0 0.0
        %360 = vmatprep.subr.mxu0 0.0
        %361 = vmatpush1.xpose.msra.mxu0 0.0
        %362 = vmatprep.subr.mxu0 0.0
        %363 = vmatpush1.xpose.msra.mxu0 0.0
        %364 = vmatprep.subr.mxu0 0.0
        %365 = vmatpush1.xpose.msra.mxu0 0.0
        %366 = vmatprep.subr.mxu0 0.0
        %367 = vmatpush1.xpose.msra.mxu0 0.0
        %368 = vmatprep.subr.mxu0 0.0
        %369 = vmatpush1.xpose.msra.mxu0 0.0
        %370 = vmatprep.subr.mxu0 0.0
        %371 = vmatpush1.xpose.msra.mxu0 0.0
        %372 = vmatprep.subr.mxu0 0.0
        %373 = vmatpush1.xpose.msra.mxu0 0.0
        %374 = vmatprep.subr.mxu0 0.0
        %375 = vmatpush1.xpose.msra.mxu0 0.0
        %376 = vmatprep.subr.mxu0 0.0
        %377 = vmatpush1.xpose.msra.mxu0 0.0
        %378 = vmatprep.subr.mxu0 0.0
        %379 = vmatpush1.xpose.msra.mxu0 0.0
        %380 = vmatprep.subr.mxu0 0.0
        %381 = vmatpush1.xpose.msra.mxu0 0.0
        %382 = vmatprep.subr.mxu0 0.0
        %383 = vmatpush1.xpose.msra.mxu0 0.0
        %384 = vmatprep.subr.mxu0 0.0
        %v385 = vand.u32 %v276, 4294901760
        %v386 = vsub.f32 %v276, %v385
        %v387 = vand.u32 %v386, 4294901760
        %v388 = vsub.f32 %v386, %v387
        %v389 = vand.u32 %v388, 4294901760
        %390 = vmatpush1.xpose.msra.mxu0 %v389
        %391 = vmatprep.subr.mxu0 0.0
        %392 = vmatpush2.xpose.msra.mxu0 0.0
        %393 = vmatprep.subr.mxu0 0.0
        %394 = vmatpush2.xpose.msra.mxu0 0.0
        %395 = vmatprep.subr.mxu0 0.0
        %396 = vmatpush2.xpose.msra.mxu0 0.0
        %397 = vmatprep.subr.mxu0 0.0
        %398 = vmatpush2.xpose.msra.mxu0 0.0
        %399 = vmatprep.subr.mxu0 0.0
        %400 = vmatpush2.xpose.msra.mxu0 0.0
        %401 = vmatprep.subr.mxu0 0.0
        %402 = vmatpush2.xpose.msra.mxu0 0.0
        %403 = vmatprep.subr.mxu0 0.0
        %404 = vmatpush2.xpose.msra.mxu0 0.0
        %405 = vmatprep.subr.mxu0 0.0
        %406 = vmatpush2.xpose.msra.mxu0 0.0
        %407 = vmatprep.subr.mxu0 0.0
        %408 = vmatpush2.xpose.msra.mxu0 0.0
        %409 = vmatprep.subr.mxu0 0.0
        %410 = vmatpush2.xpose.msra.mxu0 0.0
        %411 = vmatprep.subr.mxu0 0.0
        %412 = vmatpush2.xpose.msra.mxu0 0.0
        %413 = vmatprep.subr.mxu0 0.0
        %414 = vmatpush2.xpose.msra.mxu0 0.0
        %415 = vmatprep.subr.mxu0 0.0
        %416 = vmatpush2.xpose.msra.mxu0 0.0
        %417 = vmatprep.subr.mxu0 0.0
        %418 = vmatpush2.xpose.msra.mxu0 0.0
        %419 = vmatprep.subr.mxu0 0.0
        %420 = vmatpush2.xpose.msra.mxu0 0.0
        %421 = vmatprep.subr.mxu0 0.0
        %422 = vmatpush2.xpose.msra.mxu0 0.0
        %423 = vmatprep.mubr.f32.mxu0 0.0
        %v424 = vand.u32 %v273, 4294901760
        %425 = vmatmul.mubr.f32.gmra.mxu0 %v424
        %v426 = vpop.f32.mrf.mxu0
        %v427 = vadd.f32 %v351, %v426
        %v428 = vpop.f32.mrf.mxu0
        %429 = vdwg.mxu0
        %430 = vmatprep.subr.mxu0 0.0
        %431 = vmatpush1.xpose.msra.mxu0 0.0
        %432 = vmatprep.subr.mxu0 0.0
        %433 = vmatpush1.xpose.msra.mxu0 0.0
        %434 = vmatprep.subr.mxu0 0.0
        %435 = vmatpush1.xpose.msra.mxu0 0.0
        %436 = vmatprep.subr.mxu0 0.0
        %437 = vmatpush1.xpose.msra.mxu0 0.0
        %438 = vmatprep.subr.mxu0 0.0
        %439 = vmatpush1.xpose.msra.mxu0 0.0
        %440 = vmatprep.subr.mxu0 0.0
        %441 = vmatpush1.xpose.msra.mxu0 0.0
        %442 = vmatprep.subr.mxu0 0.0
        %443 = vmatpush1.xpose.msra.mxu0 0.0
        %444 = vmatprep.subr.mxu0 0.0
        %445 = vmatpush1.xpose.msra.mxu0 0.0
        %446 = vmatprep.subr.mxu0 0.0
        %447 = vmatpush1.xpose.msra.mxu0 0.0
        %448 = vmatprep.subr.mxu0 0.0
        %449 = vmatpush1.xpose.msra.mxu0 0.0
        %450 = vmatprep.subr.mxu0 0.0
        %451 = vmatpush1.xpose.msra.mxu0 0.0
        %452 = vmatprep.subr.mxu0 0.0
        %453 = vmatpush1.xpose.msra.mxu0 0.0
        %454 = vmatprep.subr.mxu0 0.0
        %455 = vmatpush1.xpose.msra.mxu0 0.0
        %456 = vmatprep.subr.mxu0 0.0
        %457 = vmatpush1.xpose.msra.mxu0 0.0
        %458 = vmatprep.subr.mxu0 0.0
        %459 = vmatpush1.xpose.msra.mxu0 0.0
        %460 = vmatprep.subr.mxu0 0.0
        %v461 = vand.u32 %v276, 4294901760
        %v462 = vsub.f32 %v276, %v461
        %463 = vmatpush1.xpose.msra.mxu0 %v462
        %464 = vmatprep.subr.mxu0 0.0
        %465 = vmatpush2.xpose.msra.mxu0 0.0
        %466 = vmatprep.subr.mxu0 0.0
        %467 = vmatpush2.xpose.msra.mxu0 0.0
        %468 = vmatprep.subr.mxu0 0.0
        %469 = vmatpush2.xpose.msra.mxu0 0.0
        %470 = vmatprep.subr.mxu0 0.0
        %471 = vmatpush2.xpose.msra.mxu0 0.0
        %472 = vmatprep.subr.mxu0 0.0
        %473 = vmatpush2.xpose.msra.mxu0 0.0
        %474 = vmatprep.subr.mxu0 0.0
        %475 = vmatpush2.xpose.msra.mxu0 0.0
        %476 = vmatprep.subr.mxu0 0.0
        %477 = vmatpush2.xpose.msra.mxu0 0.0
        %478 = vmatprep.subr.mxu0 0.0
        %479 = vmatpush2.xpose.msra.mxu0 0.0
        %480 = vmatprep.subr.mxu0 0.0
        %481 = vmatpush2.xpose.msra.mxu0 0.0
        %482 = vmatprep.subr.mxu0 0.0
        %483 = vmatpush2.xpose.msra.mxu0 0.0
        %484 = vmatprep.subr.mxu0 0.0
        %485 = vmatpush2.xpose.msra.mxu0 0.0
        %486 = vmatprep.subr.mxu0 0.0
        %487 = vmatpush2.xpose.msra.mxu0 0.0
        %488 = vmatprep.subr.mxu0 0.0
        %489 = vmatpush2.xpose.msra.mxu0 0.0
        %490 = vmatprep.subr.mxu0 0.0
        %491 = vmatpush2.xpose.msra.mxu0 0.0
        %492 = vmatprep.subr.mxu0 0.0
        %493 = vmatpush2.xpose.msra.mxu0 0.0
        %494 = vmatprep.subr.mxu0 0.0
        %495 = vmatpush2.xpose.msra.mxu0 0.0
        %496 = vmatprep.mubr.f32.mxu0 0.0
        %v497 = vand.u32 %v273, 4294901760
        %v498 = vsub.f32 %v273, %v497
        %499 = vmatmul.mubr.f32.gmra.mxu0 %v498
        %v500 = vpop.f32.mrf.mxu0
        %v501 = vadd.f32 %v427, %v500
        %v502 = vpop.f32.mrf.mxu0
        %503 = vdwg.mxu0
        %504 = vmatprep.subr.mxu0 0.0
        %505 = vmatpush1.xpose.msra.mxu0 0.0
        %506 = vmatprep.subr.mxu0 0.0
        %507 = vmatpush1.xpose.msra.mxu0 0.0
        %508 = vmatprep.subr.mxu0 0.0
        %509 = vmatpush1.xpose.msra.mxu0 0.0
        %510 = vmatprep.subr.mxu0 0.0
        %511 = vmatpush1.xpose.msra.mxu0 0.0
        %512 = vmatprep.subr.mxu0 0.0
        %513 = vmatpush1.xpose.msra.mxu0 0.0
        %514 = vmatprep.subr.mxu0 0.0
        %515 = vmatpush1.xpose.msra.mxu0 0.0
        %516 = vmatprep.subr.mxu0 0.0
        %517 = vmatpush1.xpose.msra.mxu0 0.0
        %518 = vmatprep.subr.mxu0 0.0
        %519 = vmatpush1.xpose.msra.mxu0 0.0
        %520 = vmatprep.subr.mxu0 0.0
        %521 = vmatpush1.xpose.msra.mxu0 0.0
        %522 = vmatprep.subr.mxu0 0.0
        %523 = vmatpush1.xpose.msra.mxu0 0.0
        %524 = vmatprep.subr.mxu0 0.0
        %525 = vmatpush1.xpose.msra.mxu0 0.0
        %526 = vmatprep.subr.mxu0 0.0
        %527 = vmatpush1.xpose.msra.mxu0 0.0
        %528 = vmatprep.subr.mxu0 0.0
        %529 = vmatpush1.xpose.msra.mxu0 0.0
        %530 = vmatprep.subr.mxu0 0.0
        %531 = vmatpush1.xpose.msra.mxu0 0.0
        %532 = vmatprep.subr.mxu0 0.0
        %533 = vmatpush1.xpose.msra.mxu0 0.0
        %534 = vmatprep.subr.mxu0 0.0
        %v535 = vand.u32 %v276, 4294901760
        %536 = vmatpush1.xpose.msra.mxu0 %v535
        %537 = vmatprep.subr.mxu0 0.0
        %538 = vmatpush2.xpose.msra.mxu0 0.0
        %539 = vmatprep.subr.mxu0 0.0
        %540 = vmatpush2.xpose.msra.mxu0 0.0
        %541 = vmatprep.subr.mxu0 0.0
        %542 = vmatpush2.xpose.msra.mxu0 0.0
        %543 = vmatprep.subr.mxu0 0.0
        %544 = vmatpush2.xpose.msra.mxu0 0.0
        %545 = vmatprep.subr.mxu0 0.0
        %546 = vmatpush2.xpose.msra.mxu0 0.0
        %547 = vmatprep.subr.mxu0 0.0
        %548 = vmatpush2.xpose.msra.mxu0 0.0
        %549 = vmatprep.subr.mxu0 0.0
        %550 = vmatpush2.xpose.msra.mxu0 0.0
        %551 = vmatprep.subr.mxu0 0.0
        %552 = vmatpush2.xpose.msra.mxu0 0.0
        %553 = vmatprep.subr.mxu0 0.0
        %554 = vmatpush2.xpose.msra.mxu0 0.0
        %555 = vmatprep.subr.mxu0 0.0
        %556 = vmatpush2.xpose.msra.mxu0 0.0
        %557 = vmatprep.subr.mxu0 0.0
        %558 = vmatpush2.xpose.msra.mxu0 0.0
        %559 = vmatprep.subr.mxu0 0.0
        %560 = vmatpush2.xpose.msra.mxu0 0.0
        %561 = vmatprep.subr.mxu0 0.0
        %562 = vmatpush2.xpose.msra.mxu0 0.0
        %563 = vmatprep.subr.mxu0 0.0
        %564 = vmatpush2.xpose.msra.mxu0 0.0
        %565 = vmatprep.subr.mxu0 0.0
        %566 = vmatpush2.xpose.msra.mxu0 0.0
        %567 = vmatprep.subr.mxu0 0.0
        %568 = vmatpush2.xpose.msra.mxu0 0.0
        %569 = vmatprep.mubr.f32.mxu0 0.0
        %v570 = vand.u32 %v273, 4294901760
        %v571 = vsub.f32 %v273, %v570
        %v572 = vand.u32 %v571, 4294901760
        %573 = vmatmul.mubr.f32.gmra.mxu0 %v572
        %v574 = vpop.f32.mrf.mxu0
        %v575 = vadd.f32 %v501, %v574
        %v576 = vpop.f32.mrf.mxu0
        %577 = vdwg.mxu0
        %578 = vmatprep.subr.mxu0 0.0
        %579 = vmatpush1.xpose.msra.mxu0 0.0
        %580 = vmatprep.subr.mxu0 0.0
        %581 = vmatpush1.xpose.msra.mxu0 0.0
        %582 = vmatprep.subr.mxu0 0.0
        %583 = vmatpush1.xpose.msra.mxu0 0.0
        %584 = vmatprep.subr.mxu0 0.0
        %585 = vmatpush1.xpose.msra.mxu0 0.0
        %586 = vmatprep.subr.mxu0 0.0
        %587 = vmatpush1.xpose.msra.mxu0 0.0
        %588 = vmatprep.subr.mxu0 0.0
        %589 = vmatpush1.xpose.msra.mxu0 0.0
        %590 = vmatprep.subr.mxu0 0.0
        %591 = vmatpush1.xpose.msra.mxu0 0.0
        %592 = vmatprep.subr.mxu0 0.0
        %593 = vmatpush1.xpose.msra.mxu0 0.0
        %594 = vmatprep.subr.mxu0 0.0
        %595 = vmatpush1.xpose.msra.mxu0 0.0
        %596 = vmatprep.subr.mxu0 0.0
        %597 = vmatpush1.xpose.msra.mxu0 0.0
        %598 = vmatprep.subr.mxu0 0.0
        %599 = vmatpush1.xpose.msra.mxu0 0.0
        %600 = vmatprep.subr.mxu0 0.0
        %601 = vmatpush1.xpose.msra.mxu0 0.0
        %602 = vmatprep.subr.mxu0 0.0
        %603 = vmatpush1.xpose.msra.mxu0 0.0
        %604 = vmatprep.subr.mxu0 0.0
        %605 = vmatpush1.xpose.msra.mxu0 0.0
        %606 = vmatprep.subr.mxu0 0.0
        %607 = vmatpush1.xpose.msra.mxu0 0.0
        %608 = vmatprep.subr.mxu0 0.0
        %v609 = vand.u32 %v276, 4294901760
        %v610 = vsub.f32 %v276, %v609
        %v611 = vand.u32 %v610, 4294901760
        %612 = vmatpush1.xpose.msra.mxu0 %v611
        %613 = vmatprep.subr.mxu0 0.0
        %614 = vmatpush2.xpose.msra.mxu0 0.0
        %615 = vmatprep.subr.mxu0 0.0
        %616 = vmatpush2.xpose.msra.mxu0 0.0
        %617 = vmatprep.subr.mxu0 0.0
        %618 = vmatpush2.xpose.msra.mxu0 0.0
        %619 = vmatprep.subr.mxu0 0.0
        %620 = vmatpush2.xpose.msra.mxu0 0.0
        %621 = vmatprep.subr.mxu0 0.0
        %622 = vmatpush2.xpose.msra.mxu0 0.0
        %623 = vmatprep.subr.mxu0 0.0
        %624 = vmatpush2.xpose.msra.mxu0 0.0
        %625 = vmatprep.subr.mxu0 0.0
        %626 = vmatpush2.xpose.msra.mxu0 0.0
        %627 = vmatprep.subr.mxu0 0.0
        %628 = vmatpush2.xpose.msra.mxu0 0.0
        %629 = vmatprep.subr.mxu0 0.0
        %630 = vmatpush2.xpose.msra.mxu0 0.0
        %631 = vmatprep.subr.mxu0 0.0
        %632 = vmatpush2.xpose.msra.mxu0 0.0
        %633 = vmatprep.subr.mxu0 0.0
        %634 = vmatpush2.xpose.msra.mxu0 0.0
        %635 = vmatprep.subr.mxu0 0.0
        %636 = vmatpush2.xpose.msra.mxu0 0.0
        %637 = vmatprep.subr.mxu0 0.0
        %638 = vmatpush2.xpose.msra.mxu0 0.0
        %639 = vmatprep.subr.mxu0 0.0
        %640 = vmatpush2.xpose.msra.mxu0 0.0
        %641 = vmatprep.subr.mxu0 0.0
        %642 = vmatpush2.xpose.msra.mxu0 0.0
        %643 = vmatprep.subr.mxu0 0.0
        %644 = vmatpush2.xpose.msra.mxu0 0.0
        %645 = vmatprep.mubr.f32.mxu0 0.0
        %v646 = vand.u32 %v273, 4294901760
        %647 = vmatmul.mubr.f32.gmra.mxu0 %v646
        %v648 = vpop.f32.mrf.mxu0
        %v649 = vadd.f32 %v575, %v648
        %v650 = vpop.f32.mrf.mxu0
        %651 = vdwg.mxu0
        %652 = vmatprep.subr.mxu0 0.0
        %653 = vmatpush1.xpose.msra.mxu0 0.0
        %654 = vmatprep.subr.mxu0 0.0
        %655 = vmatpush1.xpose.msra.mxu0 0.0
        %656 = vmatprep.subr.mxu0 0.0
        %657 = vmatpush1.xpose.msra.mxu0 0.0
        %658 = vmatprep.subr.mxu0 0.0
        %659 = vmatpush1.xpose.msra.mxu0 0.0
        %660 = vmatprep.subr.mxu0 0.0
        %661 = vmatpush1.xpose.msra.mxu0 0.0
        %662 = vmatprep.subr.mxu0 0.0
        %663 = vmatpush1.xpose.msra.mxu0 0.0
        %664 = vmatprep.subr.mxu0 0.0
        %665 = vmatpush1.xpose.msra.mxu0 0.0
        %666 = vmatprep.subr.mxu0 0.0
        %667 = vmatpush1.xpose.msra.mxu0 0.0
        %668 = vmatprep.subr.mxu0 0.0
        %669 = vmatpush1.xpose.msra.mxu0 0.0
        %670 = vmatprep.subr.mxu0 0.0
        %671 = vmatpush1.xpose.msra.mxu0 0.0
        %672 = vmatprep.subr.mxu0 0.0
        %673 = vmatpush1.xpose.msra.mxu0 0.0
        %674 = vmatprep.subr.mxu0 0.0
        %675 = vmatpush1.xpose.msra.mxu0 0.0
        %676 = vmatprep.subr.mxu0 0.0
        %677 = vmatpush1.xpose.msra.mxu0 0.0
        %678 = vmatprep.subr.mxu0 0.0
        %679 = vmatpush1.xpose.msra.mxu0 0.0
        %680 = vmatprep.subr.mxu0 0.0
        %681 = vmatpush1.xpose.msra.mxu0 0.0
        %682 = vmatprep.subr.mxu0 0.0
        %v683 = vand.u32 %v276, 4294901760
        %684 = vmatpush1.xpose.msra.mxu0 %v683
        %685 = vmatprep.subr.mxu0 0.0
        %686 = vmatpush2.xpose.msra.mxu0 0.0
        %687 = vmatprep.subr.mxu0 0.0
        %688 = vmatpush2.xpose.msra.mxu0 0.0
        %689 = vmatprep.subr.mxu0 0.0
        %690 = vmatpush2.xpose.msra.mxu0 0.0
        %691 = vmatprep.subr.mxu0 0.0
        %692 = vmatpush2.xpose.msra.mxu0 0.0
        %693 = vmatprep.subr.mxu0 0.0
        %694 = vmatpush2.xpose.msra.mxu0 0.0
        %695 = vmatprep.subr.mxu0 0.0
        %696 = vmatpush2.xpose.msra.mxu0 0.0
        %697 = vmatprep.subr.mxu0 0.0
        %698 = vmatpush2.xpose.msra.mxu0 0.0
        %699 = vmatprep.subr.mxu0 0.0
        %700 = vmatpush2.xpose.msra.mxu0 0.0
        %701 = vmatprep.subr.mxu0 0.0
        %702 = vmatpush2.xpose.msra.mxu0 0.0
        %703 = vmatprep.subr.mxu0 0.0
        %704 = vmatpush2.xpose.msra.mxu0 0.0
        %705 = vmatprep.subr.mxu0 0.0
        %706 = vmatpush2.xpose.msra.mxu0 0.0
        %707 = vmatprep.subr.mxu0 0.0
        %708 = vmatpush2.xpose.msra.mxu0 0.0
        %709 = vmatprep.subr.mxu0 0.0
        %710 = vmatpush2.xpose.msra.mxu0 0.0
        %711 = vmatprep.subr.mxu0 0.0
        %712 = vmatpush2.xpose.msra.mxu0 0.0
        %713 = vmatprep.subr.mxu0 0.0
        %714 = vmatpush2.xpose.msra.mxu0 0.0
        %715 = vmatprep.subr.mxu0 0.0
        %716 = vmatpush2.xpose.msra.mxu0 0.0
        %717 = vmatprep.mubr.f32.mxu0 0.0
        %v718 = vand.u32 %v273, 4294901760
        %719 = vmatmul.mubr.f32.gmra.mxu0 %v718
        %v720 = vpop.f32.mrf.mxu0
        %v721 = vadd.f32 %v649, %v720
        %v722 = vpop.f32.mrf.mxu0
        %723 = vdwg.mxu0
        %v724 = vadd.f32 %v270, %v721
        %vm725 = vcmask 57344
        %726 = vst.msk [vmem:[#allocation2] sm:$0x1] %vm725, %v724
        // Predicated region
        $region41: #{_mirt_call.1} parent=31 // pred_check
          %p727 = pneg %p262
        $region42: #{_mirt_call.1} parent=31 // pred_check_branch
          %729 = sbr.rel (%p727) target = $region44
        $region43: #{_mirt_call.1} parent=31 // pred_region
          %v730 = vld [vmem:[#allocation2] sm:$0x1]
          %v731 = vld [vmem:[%s261] sm:$0x1]
          %v732 = vadd.f32 %v730, %v731
          %v733 = vxor.u32 %v732, 2147483648
          %v734 = vmul.f32 %v733, 1.442695
          %v735 = vpow.pop %v734
          %v736 = vadd.f32 %v735, 1.0
          %v737 = vrcp.pop %v736
          %v738 = vmul.f32 1.0, %v737
          %739 = vst.msk [vmem:[%s249] sm:$0x1] %vm725, %v738
        $region44: #{_mirt_call.1} parent=31 // pred_fallthru
          _
        %s740 = sand.u32 %s135, 1
        %s741 = scalar_lea.sflag [#allocation5], %s740
        %s742 = sand.u32 %s135, 1
        %s743 = scalar_lea.vmem [#allocation6], %s742
        // Predicated region
        $region45: #{_mirt_call.1} parent=31 // pred_check
          %p744 = pneg %p145
        $region46: #{_mirt_call.1} parent=31 // pred_check_branch
          %746 = sbr.rel (%p744) target = $region48
        $region47: #{_mirt_call.1} parent=31 // pred_region
          %s748 = ssub.s32 16, 16
          %749 = vsyncadd %s741, %s748
          %s750 = sadd.s32 %s26, %s25
          %s751 = smul.addr %s750, 16
          %s752 = scalar_lea.hbm %s3, %s751
          %s754 = sshll.u32 %s743, 4
          %s755 = int_to_ptr.vmem [resolvable:$true] %s754
          %757 = dma.vmem_to_hbm [thread:$0]  %s755, 16, %s752, %s741
        $region48: #{_mirt_call.1} parent=31 // pred_fallthru
          _
      $region32: #{_mirt_call.1} parent=5 // pred_fallthru
        _
      %p758 = scmp.le.s32.totalorder 2, %s15
      // Predicated region
      $region49: #{_mirt_call.1} parent=5 // pred_check
        %p759 = pneg %p758
      $region50: #{_mirt_call.1} parent=5 // pred_check_branch
        %761 = sbr.rel (%p759) target = $region52
      $region51: #{_mirt_call.1} parent=5 // pred_region
        %s762 = ssub.s32 %s15, 2
        // Predicated region
        $region53: #{_mirt_call.1} parent=51 // pred_check
          %p763 = pneg %p151
        $region54: #{_mirt_call.1} parent=51 // pred_check_branch
          %765 = sbr.rel (%p763) target = $region56
        $region55: #{_mirt_call.1} parent=51 // pred_region
          %s766 = sand.u32 %s136, 1
          %s767 = scalar_lea.sflag [#allocation5], %s766
          %s768 = sand.u32 %s136, 1
          %s769 = scalar_lea.vmem [#allocation6], %s768
          %770 = dma.done %s767, 16
        $region56: #{_mirt_call.1} parent=51 // pred_fallthru
          _
      $region52: #{_mirt_call.1} parent=5 // pred_fallthru
        _
    $region6: #{_mirt_call.1} parent=1 // loop_footer
      %s19 = sadd.s32 1, %s15
    $region7: #{_mirt_call.1} parent=1 // loop_footer_branch
      %14 = sbr.rel target = $region3
    $region8: #{_mirt_call.1} parent=1 // loop_exit
      _
    %771 = vsyncpa [#allocation4], 1
    %s772 = scalar_lea.sflag [#allocation4], 1
    %773 = vsyncpa %s772, 1
    %774 = vsyncpa [#allocation5], 1
    %s775 = scalar_lea.sflag [#allocation5], 1
    %776 = vsyncpa %s775, 1

// kernel: _mirt_call.1
$region0: #{_mirt_call.1}
  #allocation0 [shape = 'u32[]', space=smem, size = 0x4, offset = 0x4, fixed_abs, tag = 'smem constant byte address 0x4 - core index']
  #allocation1 [shape = 'u32[144,128]{1,0:T(1,128)}', space=vmem, size = 0x12000, scoped, tag = 'internal scratch']
  #allocation2 [shape = 'f32[1,1,8]{2,1,0:T(1,128)}', space=vmem, size = 0x200, scoped, tag = 'scratch operand']
  %s0 = inlined_call_operand.hbm [shape: f32[2,8,32], index: 0, kind: input, shape index: {}]
  %s1 = inlined_call_operand.vmem [shape: f32[2,1,32], index: 1, kind: input, shape index: {}]
  %s2 = inlined_call_operand.vmem [shape: f32[2,1,8], index: 2, kind: input, shape index: {}]
  %s3 = inlined_call_operand.hbm [shape: f32[2,1,8], index: 3, kind: output, shape index: {}]
  %s4 = sld [smem:[#allocation0]]
  $region57: #{_mirt_call.1} parent=0
    _
  %s6 = ssub.s32 1, %s4
  %s7 = scalar_select 0, %s6, %s4
  $region1: #{_mirt_call.1} parent=0
    #allocation3 [shape = 'u8[8192]{0}', space=vmem, size = 0x2000, scoped, tag = 'input window, operand 0']
    #allocation4 [shape = 's32[2]{0}', space=sflag, size = 0x8, scoped, tag = 'scoped memory for _mirt_call.1']
    #allocation5 [shape = 's32[2]{0}', space=sflag, size = 0x8, scoped, tag = 'scoped memory for _mirt_call.1']
    #allocation6 [shape = 'u8[1024]{0}', space=vmem, size = 0x400, scoped, tag = 'output window, operand 0']
    %8 = vsyncpa [#allocation4], 0
    %s9 = scalar_lea.sflag [#allocation4], 1
    %10 = vsyncpa %s9, 0
    %11 = vsyncpa [#allocation5], 0
    %s12 = scalar_lea.sflag [#allocation5], 1
    %13 = vsyncpa %s12, 0
    loop: start=0, step=1, limit=4
    $region2: #{_mirt_call.1} parent=1 // loop_pre_header
      _
    $region3: #{_mirt_call.1} parent=1 // loop_header
      %s15 = sphi 0, %s19
      %p16 = scmp.ge.s32.totalorder %s15, 4
      %s22 = sphi 0, %s41
      %s23 = sphi 0, %s37
      %s24 = sphi 0, %s33
      %s25 = sphi 0, %s22
      %s26 = sphi 0, %s23
      %s27 = sphi 0, %s24
      %s28 = sphi 0, %s25
      %s29 = sphi 0, %s26
      %s30 = sphi 0, %s27
      %s48 = sphi 0, %s50
      %s51 = sphi 0, %s48
      %s52 = sphi 0, %s51
      %s68 = sphi 0, %s52
      %s76 = sphi 0, %s78
      %s79 = sphi 0, %s76
      %s80 = sphi 0, %s79
      %s96 = sphi 0, %s80
      %s104 = sphi 0, %s106
      %s107 = sphi 0, %s104
      %s108 = sphi 0, %s107
      %s124 = sphi 0, %s108
      %s132 = sphi 0, %s134
      %s135 = sphi 0, %s132
      %s136 = sphi 0, %s135
      %s152 = sphi 0, %s136
    $region4: #{_mirt_call.1} parent=1 // loop_header_branch
      %18 = sbr.rel (%p16) target = $region8
    $region5: #{_mirt_call.1} parent=1 // loop_body
      %s20 = ssub.s32 %s15, 1
      %s21 = ssub.s32 %s15, 2
      %s31 = sadd.s32 1, %s24
      %p32 = scmp.ge.s32.totalorder %s31, 1
      %s33 = scalar_select %p32, 0, %s31
      %s34 = sadd.s32 1, %s23
      %s35 = scalar_select %p32, %s34, %s23
      %p36 = scmp.ge.s32.totalorder %s35, 1
      %s37 = scalar_select %p36, 0, %s35
      %s38 = sadd.s32 1, %s22
      %s39 = scalar_select %p36, %s38, %s22
      %p40 = scmp.ge.s32.totalorder %s39, 2
      %s41 = scalar_select %p40, 0, %s39
      %s42 = ssub.s32 %s22, %s41
      %s43 = ssub.s32 %s23, %s37
      %s44 = sor.u32 %s42, %s43
      %s45 = ssub.s32 %s24, %s33
      %s46 = sor.u32 %s44, %s45
      %p47 = scmp.eq.s32.totalorder %s46, 0
      %s49 = sadd.s32 %s48, 1
      %s50 = scalar_select %p47, %s48, %s49
      %p53 = pneg %p47
      %p54 = scmp.eq.s32.totalorder %s15, 1
      %p55 = por %p53, %p54
      %p56 = scmp.ne.s32.totalorder %s48, %s51
      %p57 = scmp.eq.s32.totalorder %s15, 0
      %p58 = por %p56, %p57
      %p59 = scmp.ne.s32.totalorder %s48, %s51
      %p60 = scmp.eq.s32.totalorder %s20, 1
      %p61 = por %p59, %p60
      %p62 = scmp.ne.s32.totalorder %s51, %s52
      %p63 = scmp.eq.s32.totalorder %s20, 0
      %p64 = por %p62, %p63
      %p65 = scmp.ne.s32.totalorder %s51, %s52
      %p66 = scmp.eq.s32.totalorder %s21, 1
      %p67 = por %p65, %p66
      %p69 = scmp.ne.s32.totalorder %s52, %s68
      %p70 = scmp.eq.s32.totalorder %s21, 0
      %p71 = por %p69, %p70
      %s72 = ssub.s32 %s22, %s41
      %s73 = ssub.s32 %s24, %s33
      %s74 = sor.u32 %s72, %s73
      %p75 = scmp.eq.s32.totalorder %s74, 0
      %s77 = sadd.s32 %s76, 1
      %s78 = scalar_select %p75, %s76, %s77
      %p81 = pneg %p75
      %p82 = scmp.eq.s32.totalorder %s15, 1
      %p83 = por %p81, %p82
      %p84 = scmp.ne.s32.totalorder %s76, %s79
      %p85 = scmp.eq.s32.totalorder %s15, 0
      %p86 = por %p84, %p85
      %p87 = scmp.ne.s32.totalorder %s76, %s79
      %p88 = scmp.eq.s32.totalorder %s20, 1
      %p89 = por %p87, %p88
      %p90 = scmp.ne.s32.totalorder %s79, %s80
      %p91 = scmp.eq.s32.totalorder %s20, 0
      %p92 = por %p90, %p91
      %p93 = scmp.ne.s32.totalorder %s79, %s80
      %p94 = scmp.eq.s32.totalorder %s21, 1
      %p95 = por %p93, %p94
      %p97 = scmp.ne.s32.totalorder %s80, %s96
      %p98 = scmp.eq.s32.totalorder %s21, 0
      %p99 = por %p97, %p98
      %s100 = ssub.s32 %s22, %s41
      %s101 = ssub.s32 %s23, %s37
      %s102 = sor.u32 %s100, %s101
      %p103 = scmp.eq.s32.totalorder %s102, 0
      %s105 = sadd.s32 %s104, 1
      %s106 = scalar_select %p103, %s104, %s105
      %p109 = pneg %p103
      %p110 = scmp.eq.s32.totalorder %s15, 1
      %p111 = por %p109, %p110
      %p112 = scmp.ne.s32.totalorder %s104, %s107
      %p113 = scmp.eq.s32.totalorder %s15, 0
      %p114 = por %p112, %p113
      %p115 = scmp.ne.s32.totalorder %s104, %s107
      %p116 = scmp.eq.s32.totalorder %s20, 1
      %p117 = por %p115, %p116
      %p118 = scmp.ne.s32.totalorder %s107, %s108
      %p119 = scmp.eq.s32.totalorder %s20, 0
      %p120 = por %p118, %p119
      %p121 = scmp.ne.s32.totalorder %s107, %s108
      %p122 = scmp.eq.s32.totalorder %s21, 1
      %p123 = por %p121, %p122
      %p125 = scmp.ne.s32.totalorder %s108, %s124
      %p126 = scmp.eq.s32.totalorder %s21, 0
      %p127 = por %p125, %p126
      %s128 = ssub.s32 %s22, %s41
      %s129 = ssub.s32 %s23, %s37
      %s130 = sor.u32 %s128, %s129
      %p131 = scmp.eq.s32.totalorder %s130, 0
      %s133 = sadd.s32 %s132, 1
      %s134 = scalar_select %p131, %s132, %s133
      %p137 = pneg %p131
      %p138 = scmp.eq.s32.totalorder %s15, 1
      %p139 = por %p137, %p138
      %p140 = scmp.ne.s32.totalorder %s132, %s135
      %p141 = scmp.eq.s32.totalorder %s15, 0
      %p142 = por %p140, %p141
      %p143 = scmp.ne.s32.totalorder %s132, %s135
      %p144 = scmp.eq.s32.totalorder %s20, 1
      %p145 = por %p143, %p144
      %p146 = scmp.ne.s32.totalorder %s135, %s136
      %p147 = scmp.eq.s32.totalorder %s20, 0
      %p148 = por %p146, %p147
      %p149 = scmp.ne.s32.totalorder %s135, %s136
      %p150 = scmp.eq.s32.totalorder %s21, 1
      %p151 = por %p149, %p150
      %p153 = scmp.ne.s32.totalorder %s136, %s152
      %p154 = scmp.eq.s32.totalorder %s21, 0
      %p155 = por %p153, %p154
      %p156 = scmp.le.s32.totalorder 1, %s15
      %p157 = scmp.lt.s32.totalorder %s15, 3
      %p158 = pnand %p156, %p157
      %p159 = pneg %p158
      // Predicated region
      $region9: #{_mirt_call.1} parent=5 // pred_check
        _
      $region10: #{_mirt_call.1} parent=5 // pred_check_branch
        %161 = sbr.rel (%p158) target = $region12
      $region11: #{_mirt_call.1} parent=5 // pred_region
        %s162 = ssub.s32 %s15, 1
      $region12: #{_mirt_call.1} parent=5 // pred_fallthru
        _
      %p163 = scmp.lt.s32.totalorder %s15, 2
      // Predicated region
      $region13: #{_mirt_call.1} parent=5 // pred_check
        %p164 = pneg %p163
      $region14: #{_mirt_call.1} parent=5 // pred_check_branch
        %166 = sbr.rel (%p164) target = $region16
      $region15: #{_mirt_call.1} parent=5 // pred_region
        // Predicated region
        $region17: #{_mirt_call.1} parent=15 // pred_check
          %p167 = pneg %p58
        $region18: #{_mirt_call.1} parent=15 // pred_check_branch
          %169 = sbr.rel (%p167) target = $region20
        $region19: #{_mirt_call.1} parent=15 // pred_region
          %s170 = sand.u32 %s48, 1
          %s171 = scalar_lea.sflag [#allocation4], %s170
          %s172 = sand.u32 %s48, 1
          %s173 = smul.addr %s172, 8
          %s174 = scalar_lea.vmem [#allocation3], %s173
          %s176 = ssub.s32 128, 128
          %177 = vsyncadd %s171, %s176
          %s178 = sadd.s32 %s24, %s23
          %s179 = sadd.s32 %s178, %s22
          %s180 = smul.addr %s179, 128
          %s181 = scalar_lea.hbm %s0, %s180
          %s183 = sshll.u32 %s174, 4
          %s184 = int_to_ptr.vmem [resolvable:$true] %s183
          %186 = dma.hbm_to_vmem [thread:$0]  %s181, 128, %s184, %s171
        $region20: #{_mirt_call.1} parent=15 // pred_fallthru
          _
        // Predicated region
        $region21: #{_mirt_call.1} parent=15 // pred_check
          %p187 = pneg %p86
        $region22: #{_mirt_call.1} parent=15 // pred_check_branch
          %189 = sbr.rel (%p187) target = $region24
        $region23: #{_mirt_call.1} parent=15 // pred_region
          %p190 = scmp.lt.s32.totalorder %s22, 1
          %s191 = scalar_select %p190, %s22, 1
          %p192 = scmp.lt.s32.totalorder %s24, 0
          %s193 = scalar_select %p192, %s24, 0
          %s194 = sadd.s32 %s193, %s191
          %s195 = scalar_lea.vmem %s1, %s194
        $region24: #{_mirt_call.1} parent=15 // pred_fallthru
          _
        // Predicated region
        $region25: #{_mirt_call.1} parent=15 // pred_check
          %p196 = pneg %p114
        $region26: #{_mirt_call.1} parent=15 // pred_check_branch
          %198 = sbr.rel (%p196) target = $region28
        $region27: #{_mirt_call.1} parent=15 // pred_region
          %p199 = scmp.lt.s32.totalorder %s22, 1
          %s200 = scalar_select %p199, %s22, 1
          %p201 = scmp.lt.s32.totalorder %s23, 0
          %s202 = scalar_select %p201, %s23, 0
          %s203 = sadd.s32 %s202, %s200
          %s204 = scalar_lea.vmem %s2, %s203
        $region28: #{_mirt_call.1} parent=15 // pred_fallthru
          _
      $region16: #{_mirt_call.1} parent=5 // pred_fallthru
        _
      %p205 = scmp.le.s32.totalorder 1, %s15
      %p206 = scmp.lt.s32.totalorder %s15, 3
      %p207 = pnand %p205, %p206
      %p208 = pneg %p207
      // Predicated region
      $region29: #{_mirt_call.1} parent=5 // pred_check
        _
      $region30: #{_mirt_call.1} parent=5 // pred_check_branch
        %210 = sbr.rel (%p207) target = $region32
      $region31: #{_mirt_call.1} parent=5 // pred_region
        %s211 = ssub.s32 %s15, 1
        %s212 = sand.u32 %s51, 1
        %s213 = scalar_lea.sflag [#allocation4], %s212
        %s214 = sand.u32 %s51, 1
        %s215 = smul.addr %s214, 8
        %s216 = scalar_lea.vmem [#allocation3], %s215
        // Predicated region
        $region33: #{_mirt_call.1} parent=31 // pred_check
          %p217 = pneg %p64
        $region34: #{_mirt_call.1} parent=31 // pred_check_branch
          %219 = sbr.rel (%p217) target = $region36
        $region35: #{_mirt_call.1} parent=31 // pred_region
          %220 = dma.done %s213, 128
        $region36: #{_mirt_call.1} parent=31 // pred_fallthru
          _
        %s221 = sand.u32 %s51, 1
        %s222 = scalar_lea.sflag [#allocation4], %s221
        %s223 = sand.u32 %s51, 1
        %s224 = smul.addr %s223, 8
        %s225 = scalar_lea.vmem [#allocation3], %s224
        %p226 = pneg %p64
        %p227 = pneg %p61
        %p228 = scmp.lt.s32.totalorder %s25, 1
        %s229 = scalar_select %p228, %s25, 1
        %p230 = scmp.lt.s32.totalorder %s27, 0
        %s231 = scalar_select %p230, %s27, 0
        %s232 = sadd.s32 %s231, %s229
        %s233 = scalar_lea.vmem %s1, %s232
        %p234 = pneg %p92
        %p235 = pneg %p89
        %p236 = scmp.lt.s32.totalorder %s25, 1
        %s237 = scalar_select %p236, %s25, 1
        %p238 = scmp.lt.s32.totalorder %s26, 0
        %s239 = scalar_select %p238, %s26, 0
        %s240 = sadd.s32 %s239, %s237
        %s241 = scalar_lea.vmem %s2, %s240
        %p242 = pneg %p120
        %p243 = pneg %p117
        %p244 = pneg %p148
        %p245 = pneg %p145
        %s246 = sand.u32 %s135, 1
        %s247 = scalar_lea.sflag [#allocation5], %s246
        %s248 = sand.u32 %s135, 1
        %s249 = scalar_lea.vmem [#allocation6], %s248
        %p250 = scmp.lt.s32.totalorder %s25, 1
        %s251 = scalar_select %p250, %s25, 1
        %p252 = scmp.lt.s32.totalorder %s27, 0
        %s253 = scalar_select %p252, %s27, 0
        %s254 = sadd.s32 %s253, %s251
        %s255 = scalar_lea.vmem %s1, %s254
        %p256 = scmp.lt.s32.totalorder %s25, 1
        %s257 = scalar_select %p256, %s25, 1
        %p258 = scmp.lt.s32.totalorder %s26, 0
        %s259 = scalar_select %p258, %s26, 0
        %s260 = sadd.s32 %s259, %s257
        %s261 = scalar_lea.vmem %s2, %s260
        %p262 = scmp.eq.s32.totalorder %s27, 0
        // Predicated region
        $region37: #{_mirt_call.1} parent=31 // pred_check
          %p263 = pneg %p262
        $region38: #{_mirt_call.1} parent=31 // pred_check_branch
          %265 = sbr.rel (%p263) target = $region40
        $region39: #{_mirt_call.1} parent=31 // pred_region
          %vm266 = vcmask 57344
          %267 = vst.msk [vmem:[#allocation2] sm:$0x1] %vm266, 0.0
        $region40: #{_mirt_call.1} parent=31 // pred_fallthru
          _
        %v268 = vld [vmem:[%s216] sm:$0xff]
        %v269 = vld [vmem:[%s255] sm:$0x1]
        %v270 = vld [vmem:[#allocation2] sm:$0x1]
        %v272 = vlaneseq
        %v273 = vshrl.u32 %v272, 7
        %v274 = vsub.s32 0, %v273
        %v275 = vrot.slane %v269, %v274
        %v277 = vmul.f32 %v268, %v275
        %vm278 = vcmask 261120
        %v279 = vsel %vm278, %v277, 0.0
        %280 = vadd.xlane.f32.xlu0 %v279
        %v281 = vpop.xlane.xlu0 %280
        %v283 = vlaneseq
        %v284 = vshrl.u32 %v283, 7
        %v285 = vsub.s32 0, %v284
        %v286 = vrot.slane %v281, %v285
        %v287 = vlaneseq
        %v288 = vshrl.u32 %v287, 7
        %v289 = vsub.s32 1, %v288
        %v290 = vrot.slane %v281, %v289
        %v291 = vlaneseq
        %v292 = vshrl.u32 %v291, 7
        %v293 = vsub.s32 2, %v292
        %v294 = vrot.slane %v281, %v293
        %v295 = vlaneseq
        %v296 = vshrl.u32 %v295, 7
        %v297 = vsub.s32 3, %v296
        %v298 = vrot.slane %v281, %v297
        %v299 = vlaneseq
        %v300 = vshrl.u32 %v299, 7
        %v301 = vsub.s32 4, %v300
        %v302 = vrot.slane %v281, %v301
        %v303 = vlaneseq
        %v304 = vshrl.u32 %v303, 7
        %v305 = vsub.s32 5, %v304
        %v306 = vrot.slane %v281, %v305
        %v307 = vlaneseq
        %v308 = vshrl.u32 %v307, 7
        %v309 = vsub.s32 6, %v308
        %v310 = vrot.slane %v281, %v309
        %v311 = vlaneseq
        %v312 = vshrl.u32 %v311, 7
        %v313 = vsub.s32 7, %v312
        %v314 = vrot.slane %v281, %v313
        %v315 = vcombine.low %v286, %v290
        %v316 = vcombine.low %v294, %v298
        %v317 = vcombine.low %v302, %v306
        %v318 = vcombine.low %v310, %v314
        %v320 = vunpack.c.l.s4 1966171168
        %v321 = vunpack.c.0.s8 %v320
        %v322 = vlaneseq
        %v323 = vshrl.u32 %v322, 7
        %v324 = vsub.s32 %v321, %v323
        %v325 = vrot.slane %v315, %v324
        %v327 = vunpack.c.l.s4 1966171168
        %v328 = vunpack.c.0.s8 %v327
        %v329 = vlaneseq
        %v330 = vshrl.u32 %v329, 7
        %v331 = vsub.s32 %v328, %v330
        %v332 = vrot.slane %v316, %v331
        %v334 = vunpack.c.l.s4 1966171168
        %v335 = vunpack.c.0.s8 %v334
        %v336 = vlaneseq
        %v337 = vshrl.u32 %v336, 7
        %v338 = vsub.s32 %v335, %v337
        %v339 = vrot.slane %v317, %v338
        %v341 = vunpack.c.l.s4 1966171168
        %v342 = vunpack.c.0.s8 %v341
        %v343 = vlaneseq
        %v344 = vshrl.u32 %v343, 7
        %v345 = vsub.s32 %v342, %v344
        %v346 = vrot.slane %v318, %v345
        %v347 = vcombine.low %v325, %v332
        %v348 = vcombine.low %v339, %v346
        %v350 = vunpack.c.l.s4 1966171168
        %v351 = vunpack.c.0.s8 %v350
        %v352 = vlaneseq
        %v353 = vshrl.u32 %v352, 7
        %v354 = vsub.s32 %v351, %v353
        %v355 = vrot.slane %v347, %v354
        %v357 = vunpack.c.l.s4 1966171168
        %v358 = vunpack.c.0.s8 %v357
        %v359 = vlaneseq
        %v360 = vshrl.u32 %v359, 7
        %v361 = vsub.s32 %v358, %v360
        %v362 = vrot.slane %v348, %v361
        %v363 = vcombine.low %v355, %v362
        %364 = vset.pattern.permute.xlu0 0
        %365 = vperm.xlu0 %364, %v363
        %v366 = vpop.permute.xlu0 %365
        %v367 = vlaneseq
        %v368 = vand.u32 %v367, 127
        %v369 = vlaneseq
        %v370 = vshrl.u32 %v369, 7
        %v371 = vsub.s32 %v368, %v370
        %v372 = vrot.slane %v366, %v371
        %v374 = vunpack.c.l.s4 1966171168
        %v375 = vunpack.c.0.s8 %v374
        %v376 = vlaneseq
        %v377 = vshrl.u32 %v376, 7
        %v378 = vsub.s32 %v375, %v377
        %v379 = vrot.slane %v372, %v378
        %v381 = vunpack.c.l.s4 1966171168
        %v382 = vunpack.c.0.s8 %v381
        %v383 = vlaneseq
        %v384 = vshrl.u32 %v383, 7
        %v385 = vsub.s32 %v382, %v384
        %v386 = vrot.slane %v379, %v385
        %v388 = vadd.f32 %v270, %v386
        %vm389 = vcmask 57344
        %390 = vst.msk [vmem:[#allocation2] sm:$0x1] %vm389, %v388
        // Predicated region
        $region41: #{_mirt_call.1} parent=31 // pred_check
          %p391 = pneg %p262
        $region42: #{_mirt_call.1} parent=31 // pred_check_branch
          %393 = sbr.rel (%p391) target = $region44
        $region43: #{_mirt_call.1} parent=31 // pred_region
          %v394 = vld [vmem:[#allocation2] sm:$0x1]
          %v395 = vld [vmem:[%s261] sm:$0x1]
          %v396 = vadd.f32 %v394, %v395
          %v397 = vxor.u32 %v396, 2147483648
          %v398 = vmul.f32 %v397, 1.442695
          %v399 = vpow.pop %v398
          %v400 = vadd.f32 %v399, 1.0
          %v401 = vrcp.pop %v400
          %v402 = vmul.f32 1.0, %v401
          %403 = vst.msk [vmem:[%s249] sm:$0x1] %vm389, %v402
        $region44: #{_mirt_call.1} parent=31 // pred_fallthru
          _
        %s404 = sand.u32 %s135, 1
        %s405 = scalar_lea.sflag [#allocation5], %s404
        %s406 = sand.u32 %s135, 1
        %s407 = scalar_lea.vmem [#allocation6], %s406
        // Predicated region
        $region45: #{_mirt_call.1} parent=31 // pred_check
          %p408 = pneg %p145
        $region46: #{_mirt_call.1} parent=31 // pred_check_branch
          %410 = sbr.rel (%p408) target = $region48
        $region47: #{_mirt_call.1} parent=31 // pred_region
          %s412 = ssub.s32 16, 16
          %413 = vsyncadd %s405, %s412
          %s414 = sadd.s32 %s26, %s25
          %s415 = smul.addr %s414, 16
          %s416 = scalar_lea.hbm %s3, %s415
          %s418 = sshll.u32 %s407, 4
          %s419 = int_to_ptr.vmem [resolvable:$true] %s418
          %421 = dma.vmem_to_hbm [thread:$0]  %s419, 16, %s416, %s405
        $region48: #{_mirt_call.1} parent=31 // pred_fallthru
          _
      $region32: #{_mirt_call.1} parent=5 // pred_fallthru
        _
      %p422 = scmp.le.s32.totalorder 2, %s15
      // Predicated region
      $region49: #{_mirt_call.1} parent=5 // pred_check
        %p423 = pneg %p422
      $region50: #{_mirt_call.1} parent=5 // pred_check_branch
        %425 = sbr.rel (%p423) target = $region52
      $region51: #{_mirt_call.1} parent=5 // pred_region
        %s426 = ssub.s32 %s15, 2
        // Predicated region
        $region53: #{_mirt_call.1} parent=51 // pred_check
          %p427 = pneg %p151
        $region54: #{_mirt_call.1} parent=51 // pred_check_branch
          %429 = sbr.rel (%p427) target = $region56
        $region55: #{_mirt_call.1} parent=51 // pred_region
          %s430 = sand.u32 %s136, 1
          %s431 = scalar_lea.sflag [#allocation5], %s430
          %s432 = sand.u32 %s136, 1
          %s433 = scalar_lea.vmem [#allocation6], %s432
          %434 = dma.done %s431, 16
        $region56: #{_mirt_call.1} parent=51 // pred_fallthru
          _
      $region52: #{_mirt_call.1} parent=5 // pred_fallthru
        _
    $region6: #{_mirt_call.1} parent=1 // loop_footer
      %s19 = sadd.s32 1, %s15
    $region7: #{_mirt_call.1} parent=1 // loop_footer_branch
      %14 = sbr.rel target = $region3
    $region8: #{_mirt_call.1} parent=1 // loop_exit
      _
    %435 = vsyncpa [#allocation4], 1
    %s436 = scalar_lea.sflag [#allocation4], 1
    %437 = vsyncpa %s436, 1
    %438 = vsyncpa [#allocation5], 1
    %s439 = scalar_lea.sflag [#allocation5], 1
    %440 = vsyncpa %s439, 1

</llo_original>
